<compile_context>
chip_gen: v7x
topology: tpu7x:2x2x1
jax: 0.10.0
libtpu: 0.0.40
codegen_flags: <defaults>
</compile_context>

<pallas_src>
import math

import jax
import jax.numpy as jnp
from jax.experimental import pallas as pl
from jax.experimental.pallas import tpu as pltpu

IN_FEATURES = 8
OUT_FEATURES = 64
NEG_SLOPE = 0.01


def linear_leaky_kernel(x_ref, w_ref, b_ref, o_ref):
    # x_ref: (B, K), w_ref: (K, N), b_ref: (1, N), o_ref: (B, N)
    y = jnp.dot(x_ref[...], w_ref[...], preferred_element_type=jnp.float32)
    y = y + b_ref[...]
    # leaky-ReLU: equivalent to where(y > 0, y, 0.01*y) for slope in (0, 1).
    o_ref[...] = jnp.maximum(y, y * NEG_SLOPE).astype(o_ref.dtype)


def linear_leaky(x, w_t, b_row):
    """x: (B, IN), w_t: (IN, OUT), b_row: (1, OUT). Returns (B, OUT).

    No grid / pipelining: the whole problem fits trivially in VMEM, so every
    operand is mapped as a single whole-array VMEM-resident block (no
    block_shape, no index_map, no double buffering). The result is emitted at
    its logical (B, 64) shape directly — no padding, no wrapper-side slice.
    """
    B, K = x.shape
    N = w_t.shape[1]
    cost = pl.CostEstimate(
        flops=2 * B * K * N,
        transcendentals=0,
        bytes_accessed=4 * (B * K + K * N + N + B * N),
    )
    return pl.pallas_call(
        linear_leaky_kernel,
        out_shape=jax.ShapeDtypeStruct((B, N), jnp.float32),
        in_specs=[
            pl.BlockSpec(memory_space=pltpu.MemorySpace.VMEM),
            pl.BlockSpec(memory_space=pltpu.MemorySpace.VMEM),
            pl.BlockSpec(memory_space=pltpu.MemorySpace.VMEM),
        ],
        out_specs=pl.BlockSpec(memory_space=pltpu.MemorySpace.VMEM),
        cost_estimate=cost,
    )(x, w_t, b_row)


if __name__ == "__main__":
    key = jax.random.PRNGKey(0)
    k_x, k_w, k_b = jax.random.split(key, 3)

    # Input matching the module: x1 = torch.randn(1, 8)
    x1 = jax.random.normal(k_x, (1, IN_FEATURES), dtype=jnp.float32)

    # Deterministic parameter init mimicking torch.nn.Linear(8, 64):
    # uniform(-1/sqrt(in), 1/sqrt(in)) for both weight and bias.
    bound = 1.0 / math.sqrt(IN_FEATURES)
    weight = jax.random.uniform(
        k_w, (OUT_FEATURES, IN_FEATURES), dtype=jnp.float32,
        minval=-bound, maxval=bound)
    bias = jax.random.uniform(
        k_b, (OUT_FEATURES,), dtype=jnp.float32, minval=-bound, maxval=bound)

    # One-time parameter preprocessing (outside any per-step trace):
    # transpose weight to (IN, OUT) and reshape bias to a broadcastable row.
    w_t = weight.T                             # (IN, OUT)
    b_row = bias.reshape(1, OUT_FEATURES)      # (1, OUT)

    out = linear_leaky(x1, w_t, b_row)
    out = jax.block_until_ready(out)

    # Pure-JAX reference check
    ref = x1 @ w_t + b_row
    ref = jnp.where(ref > 0, ref, ref * NEG_SLOPE)
    assert out.shape == (1, OUT_FEATURES)
    assert jnp.allclose(out, ref, atol=1e-5, rtol=1e-5)

    print("KERNEL_OK")
</pallas_src>

<mosaic_0001>
module attributes {stable_mosaic.version = 11 : i64} {
  func.func @linear_leaky_kernel(%arg0: memref<1x8xf32, #tpu.memory_space<vmem>>, %arg1: memref<8x64xf32, #tpu.memory_space<vmem>>, %arg2: memref<1x64xf32, #tpu.memory_space<vmem>>, %arg3: memref<1x64xf32, #tpu.memory_space<vmem>>) attributes {dimension_semantics = [], scalar_prefetch = 0 : i64, scratch_operands = 0 : i64, tpu.core_type = #tpu.core_type<tc>} {
    %c0 = arith.constant 0 : index
    %c0_0 = arith.constant 0 : index
    %0 = vector.load %arg0[%c0, %c0_0] : memref<1x8xf32, #tpu.memory_space<vmem>>, vector<1x8xf32>
    %c0_1 = arith.constant 0 : index
    %c0_2 = arith.constant 0 : index
    %1 = vector.load %arg1[%c0_1, %c0_2] : memref<8x64xf32, #tpu.memory_space<vmem>>, vector<8x64xf32>
    %cst = arith.constant dense<0.000000e+00> : vector<1x64xf32>
    %2 = tpu.matmul %0, %1, %cst {dimension_numbers = #tpu.dot_dimension_numbers<[1], [0], [0], [1], [0, 0, 1, 1], [], []>} : vector<1x8xf32>, vector<8x64xf32>, vector<1x64xf32> -> vector<1x64xf32>
    %c0_3 = arith.constant 0 : index
    %c0_4 = arith.constant 0 : index
    %3 = vector.load %arg2[%c0_3, %c0_4] : memref<1x64xf32, #tpu.memory_space<vmem>>, vector<1x64xf32>
    %4 = arith.addf %2, %3 : vector<1x64xf32>
    %cst_5 = arith.constant 0.00999999977 : f32
    %5 = vector.broadcast %cst_5 : f32 to vector<1x64xf32>
    %6 = arith.mulf %4, %5 : vector<1x64xf32>
    %7 = arith.maximumf %4, %6 : vector<1x64xf32>
    %c0_6 = arith.constant 0 : index
    %c0_7 = arith.constant 0 : index
    %8 = vector.load %arg3[%c0_6, %c0_7] : memref<1x64xf32, #tpu.memory_space<vmem>>, vector<1x64xf32>
    tpu.vector_store %arg3[%c0_6, %c0_7], %7 {strides = array<i32>} : memref<1x64xf32, #tpu.memory_space<vmem>>, vector<1x64xf32>,
    return
  }
}

</mosaic_0001>

<llo_original>
// kernel: tpu_custom_call.1
$region0: #{tpu_custom_call.1}
  #allocation0 [shape = 'u32[]', space=smem, size = 0x4, offset = 0x4, fixed_abs, tag = 'smem constant byte address 0x4 - core index']
  #allocation1 [shape = 'u32[144,128]{1,0:T(1,128)}', space=vmem, size = 0x12000, scoped, tag = 'internal scratch']
  %s0 = inlined_call_operand.hbm [shape: f32[1,8], index: 0, kind: input, shape index: {}]
  %s1 = inlined_call_operand.hbm [shape: f32[8,64], index: 1, kind: input, shape index: {}]
  %s2 = inlined_call_operand.vmem [shape: f32[1,64], index: 2, kind: input, shape index: {}]
  %s3 = inlined_call_operand.hbm [shape: f32[1,64], index: 3, kind: output, shape index: {}]
  %s4 = sld [smem:[#allocation0]]
  $region30: #{tpu_custom_call.1} parent=0
    _
  %s6 = ssub.s32 1, %s4
  %s7 = scalar_select 0, %s6, %s4
  $region1: #{tpu_custom_call.1} parent=0
    #allocation2 [shape = 'u8[512]{0}', space=vmem, size = 0x400, scoped, tag = 'input window, operand 0, single buffered']
    #allocation3 [shape = 's32[1]{0}', space=sflag, size = 0x4, scoped, tag = 'scoped memory for tpu_custom_call.1']
    #allocation4 [shape = 's32[1]{0}', space=sflag, size = 0x4, scoped, tag = 'scoped memory for tpu_custom_call.1']
    #allocation5 [shape = 'u8[4096]{0}', space=vmem, size = 0x1000, scoped, tag = 'input window, operand 1, single buffered']
    #allocation6 [shape = 's32[1]{0}', space=sflag, size = 0x4, scoped, tag = 'scoped memory for tpu_custom_call.1']
    #allocation7 [shape = 'u8[512]{0}', space=vmem, size = 0x400, scoped, tag = 'output window, operand 0, single buffered']
    %8 = vsyncpa [#allocation3], 0
    %9 = vsyncpa [#allocation6], 0
    %10 = vsyncpa [#allocation4], 0
    // Predicated region
    $region2: #{tpu_custom_call.1} parent=1 // pred_check
      _
    $region3: #{tpu_custom_call.1} parent=1 // pred_check_branch
      %12 = sbr.rel (0) target = $region5
    $region4: #{tpu_custom_call.1} parent=1 // pred_region
      %s14 = ssub.s32 16, 16
      %15 = vsyncadd [#allocation3], %s14
      %s17 = sshll.u32 [#allocation2], 4
      %s18 = int_to_ptr.vmem [resolvable:$true] %s17
      %20 = dma.hbm_to_vmem [thread:$0]  %s0, 16, %s18, [#allocation3]
    $region5: #{tpu_custom_call.1} parent=1 // pred_fallthru
      _
    // Predicated region
    $region6: #{tpu_custom_call.1} parent=1 // pred_check
      _
    $region7: #{tpu_custom_call.1} parent=1 // pred_check_branch
      %22 = sbr.rel (0) target = $region9
    $region8: #{tpu_custom_call.1} parent=1 // pred_region
      %s24 = ssub.s32 128, 128
      %25 = vsyncadd [#allocation6], %s24
      %s27 = sshll.u32 [#allocation5], 4
      %s28 = int_to_ptr.vmem [resolvable:$true] %s27
      %30 = dma.hbm_to_vmem [thread:$0]  %s1, 128, %s28, [#allocation6]
    $region9: #{tpu_custom_call.1} parent=1 // pred_fallthru
      _
    // Predicated region
    $region10: #{tpu_custom_call.1} parent=1 // pred_check
      _
    $region11: #{tpu_custom_call.1} parent=1 // pred_check_branch
      %32 = sbr.rel (0) target = $region13
    $region12: #{tpu_custom_call.1} parent=1 // pred_region
      _
    $region13: #{tpu_custom_call.1} parent=1 // pred_fallthru
      _
    // Predicated region
    $region14: #{tpu_custom_call.1} parent=1 // pred_check
      _
    $region15: #{tpu_custom_call.1} parent=1 // pred_check_branch
      %34 = sbr.rel (0) target = $region17
    $region16: #{tpu_custom_call.1} parent=1 // pred_region
      %35 = dma.done [#allocation3], 16
    $region17: #{tpu_custom_call.1} parent=1 // pred_fallthru
      _
    // Predicated region
    $region18: #{tpu_custom_call.1} parent=1 // pred_check
      _
    $region19: #{tpu_custom_call.1} parent=1 // pred_check_branch
      %37 = sbr.rel (0) target = $region21
    $region20: #{tpu_custom_call.1} parent=1 // pred_region
      %38 = dma.done [#allocation6], 128
    $region21: #{tpu_custom_call.1} parent=1 // pred_fallthru
      _
    %v39 = vld [vmem:[#allocation2] sm:$0x1]
    %v40 = vld [vmem:[#allocation5] sm:$0xff]
    %v41 = vld [vmem:[%s2] sm:$0x1]
    %vm42 = vcmask 64512
    %v44 = vsel %vm42, %v39, 0
    %46 = vmatprep.subr.mxu0 0.0
    %47 = vmatpush1.msra.mxu0 %v40
    %48 = vmatprep.subr.mxu0 0.0
    %49 = vmatpush1.msra.mxu0 0.0
    %50 = vmatprep.subr.mxu0 0.0
    %51 = vmatpush1.msra.mxu0 0.0
    %52 = vmatprep.subr.mxu0 0.0
    %53 = vmatpush1.msra.mxu0 0.0
    %54 = vmatprep.subr.mxu0 0.0
    %55 = vmatpush1.msra.mxu0 0.0
    %56 = vmatprep.subr.mxu0 0.0
    %57 = vmatpush1.msra.mxu0 0.0
    %58 = vmatprep.subr.mxu0 0.0
    %59 = vmatpush1.msra.mxu0 0.0
    %60 = vmatprep.subr.mxu0 0.0
    %61 = vmatpush1.msra.mxu0 0.0
    %62 = vmatprep.subr.mxu0 0.0
    %63 = vmatpush1.msra.mxu0 0.0
    %64 = vmatprep.subr.mxu0 0.0
    %65 = vmatpush1.msra.mxu0 0.0
    %66 = vmatprep.subr.mxu0 0.0
    %67 = vmatpush1.msra.mxu0 0.0
    %68 = vmatprep.subr.mxu0 0.0
    %69 = vmatpush1.msra.mxu0 0.0
    %70 = vmatprep.subr.mxu0 0.0
    %71 = vmatpush1.msra.mxu0 0.0
    %72 = vmatprep.subr.mxu0 0.0
    %73 = vmatpush1.msra.mxu0 0.0
    %74 = vmatprep.subr.mxu0 0.0
    %75 = vmatpush1.msra.mxu0 0.0
    %76 = vmatprep.subr.mxu0 0.0
    %77 = vmatpush1.msra.mxu0 0.0
    %78 = vmatprep.subr.mxu0 0.0
    %79 = vmatpush1.msra.mxu0 0.0
    %80 = vmatprep.subr.mxu0 0.0
    %81 = vmatpush1.msra.mxu0 0.0
    %82 = vmatprep.subr.mxu0 0.0
    %83 = vmatpush1.msra.mxu0 0.0
    %84 = vmatprep.subr.mxu0 0.0
    %85 = vmatpush1.msra.mxu0 0.0
    %86 = vmatprep.subr.mxu0 0.0
    %87 = vmatpush1.msra.mxu0 0.0
    %88 = vmatprep.subr.mxu0 0.0
    %89 = vmatpush1.msra.mxu0 0.0
    %90 = vmatprep.subr.mxu0 0.0
    %91 = vmatpush1.msra.mxu0 0.0
    %92 = vmatprep.subr.mxu0 0.0
    %93 = vmatpush1.msra.mxu0 0.0
    %94 = vmatprep.subr.mxu0 0.0
    %95 = vmatpush1.msra.mxu0 0.0
    %96 = vmatprep.subr.mxu0 0.0
    %97 = vmatpush1.msra.mxu0 0.0
    %98 = vmatprep.subr.mxu0 0.0
    %99 = vmatpush1.msra.mxu0 0.0
    %100 = vmatprep.subr.mxu0 0.0
    %101 = vmatpush1.msra.mxu0 0.0
    %102 = vmatprep.subr.mxu0 0.0
    %103 = vmatpush1.msra.mxu0 0.0
    %104 = vmatprep.subr.mxu0 0.0
    %105 = vmatpush1.msra.mxu0 0.0
    %106 = vmatprep.subr.mxu0 0.0
    %107 = vmatpush1.msra.mxu0 0.0
    %108 = vmatprep.subr.mxu0 0.0
    %109 = vmatpush1.msra.mxu0 0.0
    %110 = vmatprep.mubr.f32.mxu0 0.0
    %111 = vmatmul.mubr.f32.gmra.mrb[0].mxu0 %v44
    %v112 = vpop.f32.mrb[0].mxu0
    %v113 = vadd.f32 %v41, %v112
    %v114 = vpop.f32.mrb[0].mxu0
    %115 = vdwg.mxu0
    %v116 = vmul.f32 %v113, 0.01
    %v117 = vmax.f32 %v113, %v116
    %vm118 = vcmask 516096
    %119 = vst.msk [vmem:[#allocation7] sm:$0x1] %vm118, %v117
    // Predicated region
    $region22: #{tpu_custom_call.1} parent=1 // pred_check
      _
    $region23: #{tpu_custom_call.1} parent=1 // pred_check_branch
      %121 = sbr.rel (0) target = $region25
    $region24: #{tpu_custom_call.1} parent=1 // pred_region
      %s123 = ssub.s32 16, 16
      %124 = vsyncadd [#allocation4], %s123
      %s126 = sshll.u32 [#allocation7], 4
      %s127 = int_to_ptr.vmem [resolvable:$true] %s126
      %129 = dma.vmem_to_hbm [thread:$0]  %s127, 16, %s3, [#allocation4]
    $region25: #{tpu_custom_call.1} parent=1 // pred_fallthru
      _
    // Predicated region
    $region26: #{tpu_custom_call.1} parent=1 // pred_check
      _
    $region27: #{tpu_custom_call.1} parent=1 // pred_check_branch
      %131 = sbr.rel (0) target = $region29
    $region28: #{tpu_custom_call.1} parent=1 // pred_region
      %132 = dma.done [#allocation4], 16
    $region29: #{tpu_custom_call.1} parent=1 // pred_fallthru
      _
    %133 = vsyncpa [#allocation3], 1
    %134 = vsyncpa [#allocation6], 1
    %135 = vsyncpa [#allocation4], 1

</llo_original>
